<compile_context>
chip_gen: v5e
topology: v5e:2x2
jax: 0.10.0
libtpu: 0.0.40
codegen_flags: <defaults>
</compile_context>

<pallas_src>
import functools
from math import sqrt

import jax
import jax.numpy as jnp
from jax.experimental import pallas as pl
from jax.experimental.pallas import tpu as pltpu


def _round_up(x, m):
    return ((x + m - 1) // m) * m


def _pick_tile(padded_dim, requested, granule):
    """Largest multiple of `granule` <= requested that divides padded_dim."""
    t = max(granule, min(requested, padded_dim))
    t = (t // granule) * granule
    while padded_dim % t:
        t -= granule
    return t


def _vmem_budget_bytes():
    cap = 64 << 20  # conservative default: v7x per-TensorCore physical VMEM
    try:
        cap = int(pltpu.get_tpu_info().vmem_capacity_bytes)
    except Exception:
        pass
    return int(cap * 0.7)


def _select_tiles(B, out_dim, in_dim, tm_req, tn_req, tk_req,
                  in_bytes, out_bytes, budget):
    sub = 16 if in_bytes == 2 else 8          # bf16 packs 2 rows per sublane
    m_pad = _round_up(B, sub)
    n_pad = _round_up(out_dim, 128)
    k_pad = _round_up(in_dim, 128)

    tm = _pick_tile(m_pad, tm_req, sub)
    tn = _pick_tile(n_pad, tn_req, 128)
    tk = _pick_tile(k_pad, tk_req, 128)

    def ws(tm_, tn_, tk_):
        acc = 0 if out_bytes == 4 else tm_ * tn_ * 4
        return (2 * tm_ * tk_ * in_bytes       # x tile, double buffered
                + 2 * tk_ * tn_ * in_bytes     # weight tile, double buffered
                + 2 * tm_ * tn_ * out_bytes    # out tile, double buffered
                + 2 * tn_ * 4                  # bias tile
                + acc)

    # Collapse K: stream x / weight exactly once per (i, j) if it fits VMEM.
    if ws(tm, tn, k_pad) <= budget:
        tk = k_pad
    # Collapse N: whole (padded) weight row-block VMEM-resident per i tile.
    if ws(tm, n_pad, tk) <= budget:
        tn = n_pad
    # Amortize per-step overhead for large batches.
    tm_big = _pick_tile(m_pad, max(tm_req, 512), sub)
    if tm_big > tm and ws(tm_big, tn, tk) <= budget:
        tm = tm_big
    # Keep >= 2 programs on the parallel axes so both v7x TensorCores get work
    # (cheap no-op for the tiny single-core shapes, n_pad < 256).
    if (m_pad // tm) * (n_pad // tn) == 1 and n_pad >= 256:
        tn = _pick_tile(n_pad, tn // 2, 128)

    return tm, tn, tk, m_pad, n_pad, k_pad


def _equal_linear_kernel(x_ref, w_ref, b_ref, o_ref, *scratch, scale):
    # f32 outputs accumulate directly into o_ref (its block index is constant
    # along the K axis); other output dtypes use the f32 VMEM scratch.
    acc_ref = scratch[0] if scratch else o_ref
    k = pl.program_id(2)

    @pl.when(k == 0)
    def _():
        acc_ref[...] = jnp.zeros(acc_ref.shape, acc_ref.dtype)

    # Plain NN matmul on the MXU: weight was pre-transposed to [K, N] in the
    # wrapper, so no in-kernel transpose contends with the MXU-push slot.
    acc_ref[...] += jnp.dot(x_ref[...], w_ref[...],
                            preferred_element_type=jnp.float32)

    @pl.when(k == pl.num_programs(2) - 1)
    def _():
        # Equalized-LR scale + bias applied once per output tile (epilogue).
        o_ref[...] = (acc_ref[...] * scale + b_ref[...]).astype(o_ref.dtype)


def prepare_equal_linear_params(weight_orig, bias, *, use_bf16=False):
    """Pad + transpose + dtype-cast the weight once ("param-init" time).

    Returns weight as [k_pad, n_pad] in the compute dtype and bias as
    [1, n_pad] f32; XLA fuses pad/transpose/cast into one pass.
    """
    out_dim, in_dim = weight_orig.shape
    n_pad = _round_up(out_dim, 128)
    k_pad = _round_up(in_dim, 128)
    w_dtype = jnp.bfloat16 if use_bf16 else jnp.float32
    w_prep = jnp.pad(
        weight_orig, ((0, n_pad - out_dim), (0, k_pad - in_dim))
    ).T.astype(w_dtype)
    b_prep = jnp.pad(bias, (0, n_pad - out_dim)).astype(jnp.float32).reshape(1, n_pad)
    return w_prep, b_prep, (in_dim, out_dim)


def equal_linear_prepared(x, w_prep, b_prep, in_dim, out_dim, *,
                          tm=256, tn=512, tk=512, use_bf16=False):
    """x: [B, in_dim]; w_prep: [k_pad, n_pad]; b_prep: [1, n_pad]."""
    B, in_dim_x = x.shape
    assert in_dim_x == in_dim
    compute_dtype = jnp.bfloat16 if use_bf16 else jnp.float32
    assert w_prep.dtype == compute_dtype, "weight prepared with different use_bf16"
    out_dtype = x.dtype
    in_bytes = jnp.dtype(compute_dtype).itemsize
    out_bytes = jnp.dtype(out_dtype).itemsize
    scale = sqrt(2.0 / in_dim)  # fan_in = in_dim (weight[0][0].numel() == 1)

    budget = _vmem_budget_bytes()
    tm, tn, tk, m_pad, n_pad, k_pad = _select_tiles(
        B, out_dim, in_dim, tm, tn, tk, in_bytes, out_bytes, budget)
    assert w_prep.shape == (k_pad, n_pad) and b_prep.shape == (1, n_pad)

    # Cast + pad x in the wrapper so the BlockSpec DMAs stream compute_dtype
    # (bf16 halves HBM bytes on the activation stream too).
    x_p = x.astype(compute_dtype)
    if (m_pad, k_pad) != (B, in_dim):
        x_p = jnp.pad(x_p, ((0, m_pad - B), (0, k_pad - in_dim)))

    grid = (m_pad // tm, n_pad // tn, k_pad // tk)
    scratch_shapes = ([] if out_dtype == jnp.float32
                      else [pltpu.VMEM((tm, tn), jnp.float32)])

    kernel = functools.partial(_equal_linear_kernel, scale=scale)

    out = pl.pallas_call(
        kernel,
        out_shape=jax.ShapeDtypeStruct((m_pad, n_pad), out_dtype),
        grid=grid,
        in_specs=[
            pl.BlockSpec((tm, tk), lambda i, j, k: (i, k)),   # x tile
            pl.BlockSpec((tk, tn), lambda i, j, k: (k, j)),   # weight tile [K, N]
            pl.BlockSpec((1, tn), lambda i, j, k: (0, j)),    # bias tile
        ],
        out_specs=pl.BlockSpec((tm, tn), lambda i, j, k: (i, j)),
        scratch_shapes=scratch_shapes,
        compiler_params=pltpu.CompilerParams(
            dimension_semantics=("parallel", "parallel", "arbitrary"),
            vmem_limit_bytes=int(budget),
        ),
    )(x_p, w_prep, b_prep)

    if (m_pad, n_pad) != (B, out_dim):
        out = out[:B, :out_dim]
    return out


def equal_linear(x, weight_orig, bias, **kwargs):
    """Convenience wrapper: prepare params (once) then run the Pallas kernel."""
    use_bf16 = kwargs.get("use_bf16", False)
    w_prep, b_prep, (in_dim, out_dim) = prepare_equal_linear_params(
        weight_orig, bias, use_bf16=use_bf16)
    return equal_linear_prepared(x, w_prep, b_prep, in_dim, out_dim, **kwargs)


if __name__ == "__main__":
    # Small shapes consistent with the module: batch=8, in_dim=32, out_dim=64
    B, in_dim, out_dim = 8, 32, 64
    key = jax.random.PRNGKey(0)
    k_x, k_w = jax.random.split(key)
    x = jax.random.normal(k_x, (B, in_dim), dtype=jnp.float32)
    # Deterministic init matching __init__: weight ~ N(0,1), bias = 0
    weight_orig = jax.random.normal(k_w, (out_dim, in_dim), dtype=jnp.float32)
    bias = jnp.zeros((out_dim,), dtype=jnp.float32)

    out = equal_linear(x, weight_orig, bias)            # f32 path
    jax.block_until_ready(out)
    ref = x @ (weight_orig * sqrt(2.0 / in_dim)).T + bias
    assert out.shape == ref.shape, "shape mismatch vs reference"
    assert jnp.allclose(out, ref, atol=1e-5, rtol=1e-5), "mismatch vs reference (f32)"

    # bf16 MXU-input path (f32 accumulation) at a mapping-network-like size.
    B2, d2 = 64, 512
    kx2, kw2 = jax.random.split(jax.random.PRNGKey(1))
    x2 = jax.random.normal(kx2, (B2, d2), dtype=jnp.float32)
    w2 = jax.random.normal(kw2, (d2, d2), dtype=jnp.float32)
    b2 = jnp.zeros((d2,), dtype=jnp.float32)
    out2 = equal_linear(x2, w2, b2, use_bf16=True)
    jax.block_until_ready(out2)
    ref2 = x2 @ (w2 * sqrt(2.0 / d2)).T + b2
    assert out2.shape == ref2.shape, "shape mismatch vs reference (bf16)"
    assert jnp.allclose(out2, ref2, atol=1e-1, rtol=5e-2), "mismatch vs reference (bf16)"

    print("KERNEL_OK")
</pallas_src>

<mosaic_0001>
module attributes {stable_mosaic.version = 11 : i64} {
  func.func @_equal_linear_kernel(%arg0: i32, %arg1: i32, %arg2: i32, %arg3: memref<8x128xf32, #tpu.memory_space<vmem>>, %arg4: memref<128x128xf32, #tpu.memory_space<vmem>>, %arg5: memref<1x128xf32, #tpu.memory_space<vmem>>, %arg6: memref<8x128xf32, #tpu.memory_space<vmem>>) attributes {dimension_semantics = [#tpu.dimension_semantics<parallel>, #tpu.dimension_semantics<parallel>, #tpu.dimension_semantics<arbitrary>], iteration_bounds = array<i64: 1, 1, 1>, scalar_prefetch = 0 : i64, scratch_operands = 0 : i64, tpu.core_type = #tpu.core_type<tc>, window_params = [{transform_indices = @transform_0, window_bounds = array<i64: 8, 128>}, {transform_indices = @transform_1, window_bounds = array<i64: 128, 128>}, {transform_indices = @transform_2, window_bounds = array<i64: 1, 128>}, {transform_indices = @transform_3, window_bounds = array<i64: 8, 128>}]} {
    %c0_i32 = arith.constant 0 : i32
    %0 = arith.cmpi eq, %arg2, %c0_i32 : i32
    %1 = arith.extui %0 : i1 to i32
    %c0_i32_0 = arith.constant 0 : i32
    %2 = arith.cmpi ne, %1, %c0_i32_0 : i32
    scf.if %2 {
      %cst_10 = arith.constant 0.000000e+00 : f32
      %12 = vector.broadcast %cst_10 : f32 to vector<8x128xf32>
      %c0_11 = arith.constant 0 : index
      %c0_12 = arith.constant 0 : index
      %13 = vector.load %arg6[%c0_11, %c0_12] : memref<8x128xf32, #tpu.memory_space<vmem>>, vector<8x128xf32>
      tpu.vector_store %arg6[%c0_11, %c0_12], %12 {strides = array<i32>} : memref<8x128xf32, #tpu.memory_space<vmem>>, vector<8x128xf32>,
    } else {
    }
    %c0 = arith.constant 0 : index
    %c0_1 = arith.constant 0 : index
    %3 = vector.load %arg6[%c0, %c0_1] : memref<8x128xf32, #tpu.memory_space<vmem>>, vector<8x128xf32>
    %c0_2 = arith.constant 0 : index
    %c0_3 = arith.constant 0 : index
    %4 = vector.load %arg3[%c0_2, %c0_3] : memref<8x128xf32, #tpu.memory_space<vmem>>, vector<8x128xf32>
    %c0_4 = arith.constant 0 : index
    %c0_5 = arith.constant 0 : index
    %5 = vector.load %arg4[%c0_4, %c0_5] : memref<128x128xf32, #tpu.memory_space<vmem>>, vector<128x128xf32>
    %cst = arith.constant dense<0.000000e+00> : vector<8x128xf32>
    %6 = tpu.matmul %4, %5, %cst {dimension_numbers = #tpu.dot_dimension_numbers<[1], [0], [0], [1], [0, 0, 1, 1], [], []>} : vector<8x128xf32>, vector<128x128xf32>, vector<8x128xf32> -> vector<8x128xf32>
    %7 = arith.addf %3, %6 : vector<8x128xf32>
    %c0_6 = arith.constant 0 : index
    %c0_7 = arith.constant 0 : index
    %8 = vector.load %arg6[%c0_6, %c0_7] : memref<8x128xf32, #tpu.memory_space<vmem>>, vector<8x128xf32>
    tpu.vector_store %arg6[%c0_6, %c0_7], %7 {strides = array<i32>} : memref<8x128xf32, #tpu.memory_space<vmem>>, vector<8x128xf32>,
    %c0_i32_8 = arith.constant 0 : i32
    %9 = arith.cmpi eq, %arg2, %c0_i32_8 : i32
    %10 = arith.extui %9 : i1 to i32
    %c0_i32_9 = arith.constant 0 : i32
    %11 = arith.cmpi ne, %10, %c0_i32_9 : i32
    scf.if %11 {
      %c0_10 = arith.constant 0 : index
      %c0_11 = arith.constant 0 : index
      %12 = vector.load %arg6[%c0_10, %c0_11] : memref<8x128xf32, #tpu.memory_space<vmem>>, vector<8x128xf32>
      %cst_12 = arith.constant 2.500000e-01 : f32
      %13 = vector.broadcast %cst_12 : f32 to vector<8x128xf32>
      %14 = arith.mulf %12, %13 : vector<8x128xf32>
      %c0_13 = arith.constant 0 : index
      %c0_14 = arith.constant 0 : index
      %15 = vector.load %arg5[%c0_13, %c0_14] : memref<1x128xf32, #tpu.memory_space<vmem>>, vector<1x128xf32>
      %16 = vector.broadcast %15 : vector<1x128xf32> to vector<8x128xf32>
      %17 = arith.addf %14, %16 : vector<8x128xf32>
      %c0_15 = arith.constant 0 : index
      %c0_16 = arith.constant 0 : index
      %18 = vector.load %arg6[%c0_15, %c0_16] : memref<8x128xf32, #tpu.memory_space<vmem>>, vector<8x128xf32>
      tpu.vector_store %arg6[%c0_15, %c0_16], %17 {strides = array<i32>} : memref<8x128xf32, #tpu.memory_space<vmem>>, vector<8x128xf32>,
    } else {
    }
    return
  }
  func.func @transform_0(%arg0: i32, %arg1: i32, %arg2: i32) -> (i32, i32) {
    %c0_i32 = arith.constant 0 : i32
    return %arg0, %arg2 : i32, i32
  }
  func.func @transform_1(%arg0: i32, %arg1: i32, %arg2: i32) -> (i32, i32) {
    %c0_i32 = arith.constant 0 : i32
    return %arg2, %arg1 : i32, i32
  }
  func.func @transform_2(%arg0: i32, %arg1: i32, %arg2: i32) -> (i32, i32) {
    %c0_i32 = arith.constant 0 : i32
    %c0_i32_0 = arith.constant 0 : i32
    return %c0_i32, %arg1 : i32, i32
  }
  func.func @transform_3(%arg0: i32, %arg1: i32, %arg2: i32) -> (i32, i32) {
    %c0_i32 = arith.constant 0 : i32
    return %arg0, %arg1 : i32, i32
  }
}

</mosaic_0001>

<llo_original>
// kernel: tpu_custom_call.1
$region0: #{tpu_custom_call.1}
  #allocation0 [shape = 'u32[]', space=smem, size = 0x4, offset = 0x4, fixed_abs, tag = 'smem constant byte address 0x4 - core index']
  #allocation1 [shape = 'u32[72,128]{1,0:T(1,128)}', space=vmem, size = 0x9000, scoped, tag = 'internal scratch']
  %s0 = inlined_call_operand.hbm [shape: f32[8,128], index: 0, kind: input, shape index: {}]
  %s1 = inlined_call_operand.hbm [shape: f32[128,128], index: 1, kind: input, shape index: {}]
  %s2 = inlined_call_operand.vmem [shape: f32[1,128], index: 2, kind: input, shape index: {}]
  %s3 = inlined_call_operand.hbm [shape: f32[8,128], index: 3, kind: output, shape index: {}]
  %s4 = sld [smem:[#allocation0]]
  $region38: #{tpu_custom_call.1} parent=0
    _
  %s6 = ssub.s32 1, %s4
  %s7 = scalar_select 0, %s6, %s4
  $region1: #{tpu_custom_call.1} parent=0
    #allocation2 [shape = 'u8[4096]{0}', space=vmem, size = 0x1000, scoped, tag = 'input window, operand 0, single buffered']
    #allocation3 [shape = 's32[1]{0}', space=sflag, size = 0x4, scoped, tag = 'scoped memory for tpu_custom_call.1']
    #allocation4 [shape = 's32[1]{0}', space=sflag, size = 0x4, scoped, tag = 'scoped memory for tpu_custom_call.1']
    #allocation5 [shape = 'u8[65536]{0}', space=vmem, size = 0x10000, scoped, tag = 'input window, operand 1, single buffered']
    #allocation6 [shape = 's32[1]{0}', space=sflag, size = 0x4, scoped, tag = 'scoped memory for tpu_custom_call.1']
    #allocation7 [shape = 'u8[4096]{0}', space=vmem, size = 0x1000, scoped, tag = 'output window, operand 0, single buffered']
    %8 = vsyncpa [#allocation3], 0
    %9 = vsyncpa [#allocation6], 0
    %10 = vsyncpa [#allocation4], 0
    // Predicated region
    $region2: #{tpu_custom_call.1} parent=1 // pred_check
      _
    $region3: #{tpu_custom_call.1} parent=1 // pred_check_branch
      %12 = sbr.rel (0) target = $region5
    $region4: #{tpu_custom_call.1} parent=1 // pred_region
      %14 = vsyncadd [#allocation3], 0
      %s16 = sshll.u32 %s0, 4
      %s17 = int_to_ptr.hbm [resolvable:$true] %s16
      %s18 = sshll.u32 [#allocation2], 4
      %s19 = int_to_ptr.vmem [resolvable:$true] %s18
      %21 = dma.hbm_to_vmem [thread:$0]  %s17, 128, %s19, [#allocation3]
    $region5: #{tpu_custom_call.1} parent=1 // pred_fallthru
      _
    // Predicated region
    $region6: #{tpu_custom_call.1} parent=1 // pred_check
      _
    $region7: #{tpu_custom_call.1} parent=1 // pred_check_branch
      %23 = sbr.rel (0) target = $region9
    $region8: #{tpu_custom_call.1} parent=1 // pred_region
      %25 = vsyncadd [#allocation6], 0
      %s26 = sshll.u32 %s1, 4
      %s27 = int_to_ptr.hbm [resolvable:$true] %s26
      %s28 = sshll.u32 [#allocation5], 4
      %s29 = int_to_ptr.vmem [resolvable:$true] %s28
      %34 = dma.hbm_to_vmem [thread:$0]  %s27, 2048, %s29, [#allocation6], 128, 128, 8
    $region9: #{tpu_custom_call.1} parent=1 // pred_fallthru
      _
    // Predicated region
    $region10: #{tpu_custom_call.1} parent=1 // pred_check
      _
    $region11: #{tpu_custom_call.1} parent=1 // pred_check_branch
      %36 = sbr.rel (0) target = $region13
    $region12: #{tpu_custom_call.1} parent=1 // pred_region
      _
    $region13: #{tpu_custom_call.1} parent=1 // pred_fallthru
      _
    // Predicated region
    $region14: #{tpu_custom_call.1} parent=1 // pred_check
      _
    $region15: #{tpu_custom_call.1} parent=1 // pred_check_branch
      %38 = sbr.rel (0) target = $region17
    $region16: #{tpu_custom_call.1} parent=1 // pred_region
      %40 = dma.done [#allocation3], 128
    $region17: #{tpu_custom_call.1} parent=1 // pred_fallthru
      _
    // Predicated region
    $region18: #{tpu_custom_call.1} parent=1 // pred_check
      _
    $region19: #{tpu_custom_call.1} parent=1 // pred_check_branch
      %42 = sbr.rel (0) target = $region21
    $region20: #{tpu_custom_call.1} parent=1 // pred_region
      %44 = dma.done [#allocation6], 2048
    $region21: #{tpu_custom_call.1} parent=1 // pred_fallthru
      _
    %p45 = scmp.eq.s32.totalorder 0, 0
    // Predicated region
    $region22: #{tpu_custom_call.1} parent=1 // pred_check
      %p46 = pneg %p45
    $region23: #{tpu_custom_call.1} parent=1 // pred_check_branch
      %48 = sbr.rel (%p46) target = $region25
    $region24: #{tpu_custom_call.1} parent=1 // pred_region
      %49 = vst [vmem:[#allocation7] sm:$0xff] 0.0
    $region25: #{tpu_custom_call.1} parent=1 // pred_fallthru
      _
    %v50 = vld [vmem:[#allocation7] sm:$0xff]
    %v51 = vld [vmem:[#allocation2] sm:$0xff]
    %v52 = vld [vmem:[#allocation5] sm:$0xff]
    %v53 = vld [vmem:[#allocation5 + $0x8] sm:$0xff]
    %v54 = vld [vmem:[#allocation5 + $0x10] sm:$0xff]
    %v55 = vld [vmem:[#allocation5 + $0x18] sm:$0xff]
    %v56 = vld [vmem:[#allocation5 + $0x20] sm:$0xff]
    %v57 = vld [vmem:[#allocation5 + $0x28] sm:$0xff]
    %v58 = vld [vmem:[#allocation5 + $0x30] sm:$0xff]
    %v59 = vld [vmem:[#allocation5 + $0x38] sm:$0xff]
    %v60 = vld [vmem:[#allocation5 + $0x40] sm:$0xff]
    %v61 = vld [vmem:[#allocation5 + $0x48] sm:$0xff]
    %v62 = vld [vmem:[#allocation5 + $0x50] sm:$0xff]
    %v63 = vld [vmem:[#allocation5 + $0x58] sm:$0xff]
    %v64 = vld [vmem:[#allocation5 + $0x60] sm:$0xff]
    %v65 = vld [vmem:[#allocation5 + $0x68] sm:$0xff]
    %v66 = vld [vmem:[#allocation5 + $0x70] sm:$0xff]
    %v67 = vld [vmem:[#allocation5 + $0x78] sm:$0xff]
    %68 = vmatpush.msra.mxu0 %v67
    %69 = vmatpush.msra.mxu0 %v66
    %70 = vmatpush.msra.mxu0 %v65
    %71 = vmatpush.msra.mxu0 %v64
    %72 = vmatpush.msra.mxu0 %v63
    %73 = vmatpush.msra.mxu0 %v62
    %74 = vmatpush.msra.mxu0 %v61
    %75 = vmatpush.msra.mxu0 %v60
    %76 = vmatpush.msra.mxu0 %v59
    %77 = vmatpush.msra.mxu0 %v58
    %78 = vmatpush.msra.mxu0 %v57
    %79 = vmatpush.msra.mxu0 %v56
    %80 = vmatpush.msra.mxu0 %v55
    %81 = vmatpush.msra.mxu0 %v54
    %82 = vmatpush.msra.mxu0 %v53
    %83 = vmatpush.msra.mxu0 %v52
    %84 = vmatmul.f32.gmra.mxu0 %v51
    %v85 = vpop.f32.mrf.mxu0
    %v86 = vadd.f32 0.0, %v85
    %87 = vdwg.mxu0
    %v88 = vadd.f32 %v50, %v86
    %89 = vst [vmem:[#allocation7] sm:$0xff] %v88
    // Predicated region
    $region26: #{tpu_custom_call.1} parent=1 // pred_check
      %p90 = pneg %p45
    $region27: #{tpu_custom_call.1} parent=1 // pred_check_branch
      %92 = sbr.rel (%p90) target = $region29
    $region28: #{tpu_custom_call.1} parent=1 // pred_region
      %v93 = vld [vmem:[#allocation7] sm:$0xff]
      %v94 = vmul.f32 %v93, 0.25
      %v95 = vld [vmem:[%s2] sm:$0x1]
      %v97 = vperm.slane %v95, 0
      %v99 = vadd.f32 %v94, %v97
      %100 = vst [vmem:[#allocation7] sm:$0xff] %v99
    $region29: #{tpu_custom_call.1} parent=1 // pred_fallthru
      _
    // Predicated region
    $region30: #{tpu_custom_call.1} parent=1 // pred_check
      _
    $region31: #{tpu_custom_call.1} parent=1 // pred_check_branch
      %102 = sbr.rel (0) target = $region33
    $region32: #{tpu_custom_call.1} parent=1 // pred_region
      %104 = vsyncadd [#allocation4], 0
      %s106 = sshll.u32 [#allocation7], 4
      %s107 = int_to_ptr.vmem [resolvable:$true] %s106
      %s108 = sshll.u32 %s3, 4
      %s109 = int_to_ptr.hbm [resolvable:$true] %s108
      %111 = dma.vmem_to_hbm [thread:$0]  %s107, 128, %s109, [#allocation4]
    $region33: #{tpu_custom_call.1} parent=1 // pred_fallthru
      _
    // Predicated region
    $region34: #{tpu_custom_call.1} parent=1 // pred_check
      _
    $region35: #{tpu_custom_call.1} parent=1 // pred_check_branch
      %113 = sbr.rel (0) target = $region37
    $region36: #{tpu_custom_call.1} parent=1 // pred_region
      %115 = dma.done [#allocation4], 128
    $region37: #{tpu_custom_call.1} parent=1 // pred_fallthru
      _
    %116 = vsyncpa [#allocation3], 1
    %117 = vsyncpa [#allocation6], 1
    %118 = vsyncpa [#allocation4], 1

</llo_original>
